<compile_context>
chip_gen: v5e
topology: v5e:2x2
jax: 0.10.0
libtpu: 0.0.40
codegen_flags: <defaults>
</compile_context>

<pallas_src>
import math

import jax
import jax.numpy as jnp
from jax.experimental import pallas as pl
from jax.experimental.pallas import tpu as pltpu

RANK = 32  # the fixed "32" inner dimension of U in the PyTorch module


def _round_up(x, m):
    return ((x + m - 1) // m) * m


def _sublane(itemsize):
    # dtype-specific sublane multiple: f32 -> 8, bf16 -> 16, int8/fp8 -> 32
    return max(8, 32 // max(1, int(itemsize)))


def _vmem_capacity_bytes():
    try:
        return int(pltpu.get_tpu_info().vmem_capacity_bytes)
    except Exception:
        return 64 << 20  # conservative (v7x per-core VMEM)


def _make_kernel(in_features, out_features, fold):
    """fold logical batch rows are packed per stored row (row-major fold) so
    the output tile is lane-dense (e.g. 2*64 = 128 lanes -> unmasked vst)."""

    def kernel(x_ref, u_ref, u2_ref, w1_ref, w2_ref, b_ref, o_ref):
        xf = x_ref[...]                                        # (tnf, fold*in)
        if fold > 1:
            # Un-fold: lane-slice each packed row, stack along sublanes.
            x = jnp.concatenate(
                [xf[:, i * in_features:(i + 1) * in_features] for i in range(fold)],
                axis=0)                                        # (fold*tnf, in)
        else:
            x = xf

        w_dtype = w1_ref.dtype
        if x.dtype != w_dtype:
            # Keep the MXU on its fast narrow path when weights are bf16.
            # (For bf16 inputs the 0.5*(s1-s2) cancellation loses a little
            #  precision; interaction math below still accumulates in f32.)
            x = x.astype(w_dtype)

        # FM-style pairwise interaction, f32 accumulation on the MXU.
        xu = jnp.dot(x, u_ref[...], preferred_element_type=jnp.float32)       # (n, 32)
        s2 = jnp.dot(x * x, u2_ref[...], preferred_element_type=jnp.float32)  # (n, 32)
        x_inter = 0.5 * (xu * xu - s2)                                        # f32

        # concat([x, x_inter]) @ W  ==  x @ W1 + x_inter @ W2
        out = jnp.dot(x, w1_ref[...], preferred_element_type=jnp.float32)
        out = out + jnp.dot(x_inter.astype(w_dtype), w2_ref[...],
                            preferred_element_type=jnp.float32)
        out = out + b_ref[...]                                 # bias already f32

        if fold > 1:
            tnf = o_ref.shape[0]
            # Re-fold: row pairs side by side along lanes -> (tnf, fold*out).
            out = jnp.concatenate(
                [out[i * tnf:(i + 1) * tnf] for i in range(fold)], axis=1)

        o_ref[...] = jnp.tanh(out).astype(o_ref.dtype)

    return kernel


def _choose_tile(N, in_features, out_features, itemsize, fold, vmem_cap):
    """Largest batch tile (in logical rows) that fits a generation-aware VMEM
    budget, rounded to the dtype sublane multiple * fold, while keeping enough
    grid steps for pipeline overlap / megacore sharding on large batches."""
    unit = _sublane(itemsize) * fold
    budget = min(32 << 20, vmem_cap // 3)                     # ~32 MiB (128-MiB parts), ~21 MiB (v7x)
    per_row = (2 * itemsize * (in_features + out_features)    # double-buffered x / out tiles
               + 4 * (2 * in_features + 3 * RANK + out_features))  # f32 temporaries
    tn = max(unit, budget // per_row)
    tn = min(tn, 16384)
    steps = 8                                                 # >= ~4 steps per v7x TensorCore
    if N > steps * unit:
        tn = min(tn, _round_up(-(-N // steps), unit))
    tn = _round_up(min(tn, max(N, unit)), unit)
    return int(tn)


def _build_call(in_features, out_features, fold, tile, n_pad, x_dtype,
                vmem_limit, cost, single_buffer_weights):
    tn_f = tile // fold
    n_f = n_pad // fold
    in_eff = fold * in_features
    out_eff = fold * out_features
    # Grid-invariant weights: single buffer (block index never changes).
    wkw = {"pipeline_mode": pl.Buffered(1)} if single_buffer_weights else {}
    in_specs = [
        pl.BlockSpec((tn_f, in_eff), lambda i: (i, 0)),                        # x tile (folded)
        pl.BlockSpec((in_features, RANK), lambda i: (0, 0), **wkw),            # U
        pl.BlockSpec((in_features, RANK), lambda i: (0, 0), **wkw),            # U^2
        pl.BlockSpec((in_features, out_features), lambda i: (0, 0), **wkw),    # W1
        pl.BlockSpec((RANK, out_features), lambda i: (0, 0), **wkw),           # W2
        pl.BlockSpec((1, out_features), lambda i: (0, 0), **wkw),              # b (f32)
    ]
    return pl.pallas_call(
        _make_kernel(in_features, out_features, fold),
        out_shape=jax.ShapeDtypeStruct((n_f, out_eff), x_dtype),
        grid_spec=pl.GridSpec(
            grid=(n_f // tn_f,),
            in_specs=in_specs,
            out_specs=pl.BlockSpec((tn_f, out_eff), lambda i: (i, 0)),
        ),
        compiler_params=pltpu.CompilerParams(
            dimension_semantics=("parallel",),
            vmem_limit_bytes=vmem_limit),
        cost_estimate=cost,
    )


def matrix_fusion_forward(x, U, W, b, *, tn=None):
    """x: (N, in_features); U: (in_features, 32); W: (in_features+32, out);
    b: (1, out). Returns (tanh(concat(x, x_inter) @ W + b), 0)."""
    N, in_features = x.shape
    out_features = W.shape[1]
    assert W.shape[0] == in_features + RANK

    itemsize = x.dtype.itemsize
    vmem_cap = _vmem_capacity_bytes()

    # Weight prep (done once, outside the grid loop).
    Uf = U.astype(jnp.float32)
    U2 = (Uf * Uf).astype(U.dtype)
    W1 = W[:in_features, :]                    # multiplies x
    W2 = W[in_features:, :]                    # multiplies x_inter
    b32 = jnp.asarray(b, dtype=jnp.float32).reshape(1, out_features)

    weight_bytes = (2 * in_features * RANK * U.dtype.itemsize
                    + (in_features + RANK) * out_features * W.dtype.itemsize
                    + out_features * 4)

    # Fold 2 batch rows per stored row when that makes the output lane-dense
    # (e.g. out_features=64 -> 128-wide unmasked stores); wrapper reshapes are
    # free row-major reinterpretations.
    want_fold = 2 if (out_features % 128 != 0 and (2 * out_features) % 128 == 0) else 1

    def _run(fold, single_buffer_weights):
        tile = tn
        if tile is None:
            tile = _choose_tile(N, in_features, out_features, itemsize, fold, vmem_cap)
        else:
            tile = _round_up(int(tile), _sublane(itemsize) * fold)
        n_pad = _round_up(N, tile)
        x_in = x if n_pad == N else jnp.pad(x, ((0, n_pad - N), (0, 0)))
        if fold > 1:
            x_in = x_in.reshape(n_pad // fold, fold * in_features)   # free reshape

        vmem_needed = (2 * tile * itemsize * (in_features + out_features)
                       + 4 * tile * (2 * in_features + 3 * RANK + out_features)
                       + (1 if single_buffer_weights else 2) * weight_bytes
                       + (4 << 20))
        vmem_upper = max(32 << 20, min(64 << 20, (vmem_cap * 3) // 4))
        vmem_limit = int(min(max(vmem_needed, 16 << 20), vmem_upper))

        cost = pl.CostEstimate(
            flops=2 * n_pad * (2 * in_features * RANK
                               + in_features * out_features
                               + RANK * out_features),
            transcendentals=n_pad * out_features,
            bytes_accessed=(n_pad * (in_features + out_features) * itemsize
                            + weight_bytes),
        )

        call = _build_call(in_features, out_features, fold, tile, n_pad,
                           x.dtype, vmem_limit, cost, single_buffer_weights)
        y = call(x_in, U, U2, W1, W2, b32)
        y = jax.block_until_ready(y)          # surface compile errors here
        if fold > 1:
            y = y.reshape(n_pad, out_features)                     # free reshape
        return y[:N] if n_pad != N else y

    # Preference ladder: folded lane-dense output + single-buffered weights,
    # falling back to plainer (previously validated) configurations.
    configs = []
    for f in ((want_fold, 1) if want_fold != 1 else (1,)):
        for sb in (True, False):
            configs.append((f, sb))
    y, err = None, None
    for f, sb in configs:
        try:
            y = _run(f, sb)
            break
        except Exception as e:                 # pragma: no cover - fallback path
            err = e
    if y is None:
        raise err

    # Second return value of the PyTorch forward is a constant 0 tensor.
    return y, jnp.array(0, dtype=jnp.int32)


def _xavier_uniform(key, shape, gain):
    fan_in, fan_out = shape[0], shape[1]
    bound = gain * math.sqrt(6.0 / (fan_in + fan_out))
    return jax.random.uniform(key, shape, dtype=jnp.float32,
                              minval=-bound, maxval=bound)


def _reference(x, U, W, b):
    s1 = jnp.matmul(x, U) ** 2
    s2 = jnp.matmul(x ** 2, U ** 2)
    x_inter = 0.5 * (s1 - s2)
    x_concat = jnp.concatenate([x, x_inter], axis=1)
    return jnp.tanh(jnp.matmul(x_concat, W) + b)


if __name__ == "__main__":
    # Small shapes consistent with the module.
    N = 16
    in_features = 48
    out_features = 64
    gain = 1.414

    key = jax.random.PRNGKey(0)
    k_x, k_u, k_w, k_b = jax.random.split(key, 4)

    x = jax.random.normal(k_x, (N, in_features), dtype=jnp.float32)
    U = _xavier_uniform(k_u, (in_features, RANK), gain)
    W = _xavier_uniform(k_w, (in_features + RANK, out_features), gain)
    b = _xavier_uniform(k_b, (1, out_features), gain)
    # NOTE: dropout is an unused constructor arg in the PyTorch module
    # (never applied in forward), so it is intentionally omitted.

    y, zero = matrix_fusion_forward(x, U, W, b)
    y = jax.block_until_ready(y)

    y_ref = _reference(x, U, W, b)
    assert y.shape == (N, out_features)
    assert int(zero) == 0
    assert jnp.allclose(y, y_ref, atol=1e-5, rtol=1e-5), (
        float(jnp.max(jnp.abs(y - y_ref))))

    # Also exercise a ragged / larger batch path (padding + folded output).
    x2 = jax.random.normal(k_x, (100, in_features), dtype=jnp.float32)
    y2, _ = matrix_fusion_forward(x2, U, W, b)
    y2 = jax.block_until_ready(y2)
    assert jnp.allclose(y2, _reference(x2, U, W, b), atol=1e-5, rtol=1e-5)

    print("KERNEL_OK")
</pallas_src>

<mosaic_0001>
module attributes {stable_mosaic.version = 11 : i64} {
  func.func @kernel(%arg0: i32, %arg1: memref<8x96xf32, #tpu.memory_space<vmem>>, %arg2: memref<48x32xf32, #tpu.memory_space<vmem>>, %arg3: memref<48x32xf32, #tpu.memory_space<vmem>>, %arg4: memref<48x64xf32, #tpu.memory_space<vmem>>, %arg5: memref<32x64xf32, #tpu.memory_space<vmem>>, %arg6: memref<1x64xf32, #tpu.memory_space<vmem>>, %arg7: memref<8x128xf32, #tpu.memory_space<vmem>>) attributes {dimension_semantics = [#tpu.dimension_semantics<parallel>], iteration_bounds = array<i64: 1>, scalar_prefetch = 0 : i64, scratch_operands = 0 : i64, tpu.core_type = #tpu.core_type<tc>, window_params = [{transform_indices = @transform_0, window_bounds = array<i64: 8, 96>}, {pipeline_mode = #tpu.pipeline_mode<synchronous>, transform_indices = @transform_1, window_bounds = array<i64: 48, 32>}, {pipeline_mode = #tpu.pipeline_mode<synchronous>, transform_indices = @transform_2, window_bounds = array<i64: 48, 32>}, {pipeline_mode = #tpu.pipeline_mode<synchronous>, transform_indices = @transform_3, window_bounds = array<i64: 48, 64>}, {pipeline_mode = #tpu.pipeline_mode<synchronous>, transform_indices = @transform_4, window_bounds = array<i64: 32, 64>}, {pipeline_mode = #tpu.pipeline_mode<synchronous>, transform_indices = @transform_5, window_bounds = array<i64: 1, 64>}, {transform_indices = @transform_6, window_bounds = array<i64: 8, 128>}]} {
    %c0 = arith.constant 0 : index
    %c0_0 = arith.constant 0 : index
    %0 = vector.load %arg1[%c0, %c0_0] : memref<8x96xf32, #tpu.memory_space<vmem>>, vector<8x96xf32>
    %1 = vector.extract_strided_slice %0 {offsets = [0, 0], sizes = [8, 48], strides = [1, 1]} : vector<8x96xf32> to vector<8x48xf32>
    %2 = vector.extract_strided_slice %0 {offsets = [0, 48], sizes = [8, 48], strides = [1, 1]} : vector<8x96xf32> to vector<8x48xf32>
    %3 = tpu.concatenate %1, %2 in 0 : vector<8x48xf32>, vector<8x48xf32> -> vector<16x48xf32>
    %c0_1 = arith.constant 0 : index
    %c0_2 = arith.constant 0 : index
    %4 = vector.load %arg2[%c0_1, %c0_2] : memref<48x32xf32, #tpu.memory_space<vmem>>, vector<48x32xf32>
    %cst = arith.constant dense<0.000000e+00> : vector<16x32xf32>
    %5 = tpu.matmul %3, %4, %cst {dimension_numbers = #tpu.dot_dimension_numbers<[1], [0], [0], [1], [0, 0, 1, 1], [], []>} : vector<16x48xf32>, vector<48x32xf32>, vector<16x32xf32> -> vector<16x32xf32>
    %6 = arith.mulf %3, %3 : vector<16x48xf32>
    %c0_3 = arith.constant 0 : index
    %c0_4 = arith.constant 0 : index
    %7 = vector.load %arg3[%c0_3, %c0_4] : memref<48x32xf32, #tpu.memory_space<vmem>>, vector<48x32xf32>
    %cst_5 = arith.constant dense<0.000000e+00> : vector<16x32xf32>
    %8 = tpu.matmul %6, %7, %cst_5 {dimension_numbers = #tpu.dot_dimension_numbers<[1], [0], [0], [1], [0, 0, 1, 1], [], []>} : vector<16x48xf32>, vector<48x32xf32>, vector<16x32xf32> -> vector<16x32xf32>
    %9 = arith.mulf %5, %5 : vector<16x32xf32>
    %10 = arith.subf %9, %8 : vector<16x32xf32>
    %cst_6 = arith.constant 5.000000e-01 : f32
    %11 = vector.broadcast %cst_6 : f32 to vector<16x32xf32>
    %12 = arith.mulf %11, %10 : vector<16x32xf32>
    %c0_7 = arith.constant 0 : index
    %c0_8 = arith.constant 0 : index
    %13 = vector.load %arg4[%c0_7, %c0_8] : memref<48x64xf32, #tpu.memory_space<vmem>>, vector<48x64xf32>
    %cst_9 = arith.constant dense<0.000000e+00> : vector<16x64xf32>
    %14 = tpu.matmul %3, %13, %cst_9 {dimension_numbers = #tpu.dot_dimension_numbers<[1], [0], [0], [1], [0, 0, 1, 1], [], []>} : vector<16x48xf32>, vector<48x64xf32>, vector<16x64xf32> -> vector<16x64xf32>
    %c0_10 = arith.constant 0 : index
    %c0_11 = arith.constant 0 : index
    %15 = vector.load %arg5[%c0_10, %c0_11] : memref<32x64xf32, #tpu.memory_space<vmem>>, vector<32x64xf32>
    %cst_12 = arith.constant dense<0.000000e+00> : vector<16x64xf32>
    %16 = tpu.matmul %12, %15, %cst_12 {dimension_numbers = #tpu.dot_dimension_numbers<[1], [0], [0], [1], [0, 0, 1, 1], [], []>} : vector<16x32xf32>, vector<32x64xf32>, vector<16x64xf32> -> vector<16x64xf32>
    %17 = arith.addf %14, %16 : vector<16x64xf32>
    %c0_13 = arith.constant 0 : index
    %c0_14 = arith.constant 0 : index
    %18 = vector.load %arg6[%c0_13, %c0_14] : memref<1x64xf32, #tpu.memory_space<vmem>>, vector<1x64xf32>
    %19 = vector.broadcast %18 : vector<1x64xf32> to vector<16x64xf32>
    %20 = arith.addf %17, %19 : vector<16x64xf32>
    %21 = vector.extract_strided_slice %20 {offsets = [0, 0], sizes = [8, 64], strides = [1, 1]} : vector<16x64xf32> to vector<8x64xf32>
    %22 = vector.extract_strided_slice %20 {offsets = [8, 0], sizes = [8, 64], strides = [1, 1]} : vector<16x64xf32> to vector<8x64xf32>
    %23 = tpu.concatenate %21, %22 in 1 : vector<8x64xf32>, vector<8x64xf32> -> vector<8x128xf32>
    %24 = math.tanh %23 : vector<8x128xf32>
    %c0_15 = arith.constant 0 : index
    %c0_16 = arith.constant 0 : index
    %25 = vector.load %arg7[%c0_15, %c0_16] : memref<8x128xf32, #tpu.memory_space<vmem>>, vector<8x128xf32>
    tpu.vector_store %arg7[%c0_15, %c0_16], %24 {strides = array<i32>} : memref<8x128xf32, #tpu.memory_space<vmem>>, vector<8x128xf32>,
    return
  }
  func.func @transform_0(%arg0: i32) -> (i32, i32) {
    %c0_i32 = arith.constant 0 : i32
    %c0_i32_0 = arith.constant 0 : i32
    return %arg0, %c0_i32 : i32, i32
  }
  func.func @transform_1(%arg0: i32) -> (i32, i32) {
    %c0_i32 = arith.constant 0 : i32
    %c0_i32_0 = arith.constant 0 : i32
    %c0_i32_1 = arith.constant 0 : i32
    return %c0_i32, %c0_i32_0 : i32, i32
  }
  func.func @transform_2(%arg0: i32) -> (i32, i32) {
    %c0_i32 = arith.constant 0 : i32
    %c0_i32_0 = arith.constant 0 : i32
    %c0_i32_1 = arith.constant 0 : i32
    return %c0_i32, %c0_i32_0 : i32, i32
  }
  func.func @transform_3(%arg0: i32) -> (i32, i32) {
    %c0_i32 = arith.constant 0 : i32
    %c0_i32_0 = arith.constant 0 : i32
    %c0_i32_1 = arith.constant 0 : i32
    return %c0_i32, %c0_i32_0 : i32, i32
  }
  func.func @transform_4(%arg0: i32) -> (i32, i32) {
    %c0_i32 = arith.constant 0 : i32
    %c0_i32_0 = arith.constant 0 : i32
    %c0_i32_1 = arith.constant 0 : i32
    return %c0_i32, %c0_i32_0 : i32, i32
  }
  func.func @transform_5(%arg0: i32) -> (i32, i32) {
    %c0_i32 = arith.constant 0 : i32
    %c0_i32_0 = arith.constant 0 : i32
    %c0_i32_1 = arith.constant 0 : i32
    return %c0_i32, %c0_i32_0 : i32, i32
  }
  func.func @transform_6(%arg0: i32) -> (i32, i32) {
    %c0_i32 = arith.constant 0 : i32
    %c0_i32_0 = arith.constant 0 : i32
    return %arg0, %c0_i32 : i32, i32
  }
}

module attributes {stable_mosaic.version = 11 : i64} {
  func.func @kernel(%arg0: i32, %arg1: memref<8x96xf32, #tpu.memory_space<vmem>>, %arg2: memref<48x32xf32, #tpu.memory_space<vmem>>, %arg3: memref<48x32xf32, #tpu.memory_space<vmem>>, %arg4: memref<48x64xf32, #tpu.memory_space<vmem>>, %arg5: memref<32x64xf32, #tpu.memory_space<vmem>>, %arg6: memref<1x64xf32, #tpu.memory_space<vmem>>, %arg7: memref<8x128xf32, #tpu.memory_space<vmem>>) attributes {dimension_semantics = [#tpu.dimension_semantics<parallel>], iteration_bounds = array<i64: 1>, scalar_prefetch = 0 : i64, scratch_operands = 0 : i64, tpu.core_type = #tpu.core_type<tc>, window_params = [{transform_indices = @transform_0, window_bounds = array<i64: 8, 96>}, {pipeline_mode = #tpu.pipeline_mode<synchronous>, transform_indices = @transform_1, window_bounds = array<i64: 48, 32>}, {pipeline_mode = #tpu.pipeline_mode<synchronous>, transform_indices = @transform_2, window_bounds = array<i64: 48, 32>}, {pipeline_mode = #tpu.pipeline_mode<synchronous>, transform_indices = @transform_3, window_bounds = array<i64: 48, 64>}, {pipeline_mode = #tpu.pipeline_mode<synchronous>, transform_indices = @transform_4, window_bounds = array<i64: 32, 64>}, {pipeline_mode = #tpu.pipeline_mode<synchronous>, transform_indices = @transform_5, window_bounds = array<i64: 1, 64>}, {transform_indices = @transform_6, window_bounds = array<i64: 8, 128>}]} {
    %c0 = arith.constant 0 : index
    %c0_0 = arith.constant 0 : index
    %0 = vector.load %arg1[%c0, %c0_0] : memref<8x96xf32, #tpu.memory_space<vmem>>, vector<8x96xf32>
    %1 = vector.extract_strided_slice %0 {offsets = [0, 0], sizes = [8, 48], strides = [1, 1]} : vector<8x96xf32> to vector<8x48xf32>
    %2 = vector.extract_strided_slice %0 {offsets = [0, 48], sizes = [8, 48], strides = [1, 1]} : vector<8x96xf32> to vector<8x48xf32>
    %3 = tpu.concatenate %1, %2 in 0 : vector<8x48xf32>, vector<8x48xf32> -> vector<16x48xf32>
    %c0_1 = arith.constant 0 : index
    %c0_2 = arith.constant 0 : index
    %4 = vector.load %arg2[%c0_1, %c0_2] : memref<48x32xf32, #tpu.memory_space<vmem>>, vector<48x32xf32>
    %cst = arith.constant dense<0.000000e+00> : vector<16x32xf32>
    %5 = tpu.matmul %3, %4, %cst {dimension_numbers = #tpu.dot_dimension_numbers<[1], [0], [0], [1], [0, 0, 1, 1], [], []>} : vector<16x48xf32>, vector<48x32xf32>, vector<16x32xf32> -> vector<16x32xf32>
    %6 = arith.mulf %3, %3 : vector<16x48xf32>
    %c0_3 = arith.constant 0 : index
    %c0_4 = arith.constant 0 : index
    %7 = vector.load %arg3[%c0_3, %c0_4] : memref<48x32xf32, #tpu.memory_space<vmem>>, vector<48x32xf32>
    %cst_5 = arith.constant dense<0.000000e+00> : vector<16x32xf32>
    %8 = tpu.matmul %6, %7, %cst_5 {dimension_numbers = #tpu.dot_dimension_numbers<[1], [0], [0], [1], [0, 0, 1, 1], [], []>} : vector<16x48xf32>, vector<48x32xf32>, vector<16x32xf32> -> vector<16x32xf32>
    %9 = arith.mulf %5, %5 : vector<16x32xf32>
    %10 = arith.subf %9, %8 : vector<16x32xf32>
    %cst_6 = arith.constant 5.000000e-01 : f32
    %11 = vector.broadcast %cst_6 : f32 to vector<16x32xf32>
    %12 = arith.mulf %11, %10 : vector<16x32xf32>
    %c0_7 = arith.constant 0 : index
    %c0_8 = arith.constant 0 : index
    %13 = vector.load %arg4[%c0_7, %c0_8] : memref<48x64xf32, #tpu.memory_space<vmem>>, vector<48x64xf32>
    %cst_9 = arith.constant dense<0.000000e+00> : vector<16x64xf32>
    %14 = tpu.matmul %3, %13, %cst_9 {dimension_numbers = #tpu.dot_dimension_numbers<[1], [0], [0], [1], [0, 0, 1, 1], [], []>} : vector<16x48xf32>, vector<48x64xf32>, vector<16x64xf32> -> vector<16x64xf32>
    %c0_10 = arith.constant 0 : index
    %c0_11 = arith.constant 0 : index
    %15 = vector.load %arg5[%c0_10, %c0_11] : memref<32x64xf32, #tpu.memory_space<vmem>>, vector<32x64xf32>
    %cst_12 = arith.constant dense<0.000000e+00> : vector<16x64xf32>
    %16 = tpu.matmul %12, %15, %cst_12 {dimension_numbers = #tpu.dot_dimension_numbers<[1], [0], [0], [1], [0, 0, 1, 1], [], []>} : vector<16x32xf32>, vector<32x64xf32>, vector<16x64xf32> -> vector<16x64xf32>
    %17 = arith.addf %14, %16 : vector<16x64xf32>
    %c0_13 = arith.constant 0 : index
    %c0_14 = arith.constant 0 : index
    %18 = vector.load %arg6[%c0_13, %c0_14] : memref<1x64xf32, #tpu.memory_space<vmem>>, vector<1x64xf32>
    %19 = vector.broadcast %18 : vector<1x64xf32> to vector<16x64xf32>
    %20 = arith.addf %17, %19 : vector<16x64xf32>
    %21 = vector.extract_strided_slice %20 {offsets = [0, 0], sizes = [8, 64], strides = [1, 1]} : vector<16x64xf32> to vector<8x64xf32>
    %22 = vector.extract_strided_slice %20 {offsets = [8, 0], sizes = [8, 64], strides = [1, 1]} : vector<16x64xf32> to vector<8x64xf32>
    %23 = tpu.concatenate %21, %22 in 1 : vector<8x64xf32>, vector<8x64xf32> -> vector<8x128xf32>
    %24 = math.tanh %23 : vector<8x128xf32>
    %c0_15 = arith.constant 0 : index
    %c0_16 = arith.constant 0 : index
    %25 = vector.load %arg7[%c0_15, %c0_16] : memref<8x128xf32, #tpu.memory_space<vmem>>, vector<8x128xf32>
    tpu.vector_store %arg7[%c0_15, %c0_16], %24 {strides = array<i32>} : memref<8x128xf32, #tpu.memory_space<vmem>>, vector<8x128xf32>,
    return
  }
  func.func @transform_0(%arg0: i32) -> (i32, i32) {
    %c0_i32 = arith.constant 0 : i32
    %c0_i32_0 = arith.constant 0 : i32
    return %arg0, %c0_i32 : i32, i32
  }
  func.func @transform_1(%arg0: i32) -> (i32, i32) {
    %c0_i32 = arith.constant 0 : i32
    %c0_i32_0 = arith.constant 0 : i32
    %c0_i32_1 = arith.constant 0 : i32
    return %c0_i32, %c0_i32_0 : i32, i32
  }
  func.func @transform_2(%arg0: i32) -> (i32, i32) {
    %c0_i32 = arith.constant 0 : i32
    %c0_i32_0 = arith.constant 0 : i32
    %c0_i32_1 = arith.constant 0 : i32
    return %c0_i32, %c0_i32_0 : i32, i32
  }
  func.func @transform_3(%arg0: i32) -> (i32, i32) {
    %c0_i32 = arith.constant 0 : i32
    %c0_i32_0 = arith.constant 0 : i32
    %c0_i32_1 = arith.constant 0 : i32
    return %c0_i32, %c0_i32_0 : i32, i32
  }
  func.func @transform_4(%arg0: i32) -> (i32, i32) {
    %c0_i32 = arith.constant 0 : i32
    %c0_i32_0 = arith.constant 0 : i32
    %c0_i32_1 = arith.constant 0 : i32
    return %c0_i32, %c0_i32_0 : i32, i32
  }
  func.func @transform_5(%arg0: i32) -> (i32, i32) {
    %c0_i32 = arith.constant 0 : i32
    %c0_i32_0 = arith.constant 0 : i32
    %c0_i32_1 = arith.constant 0 : i32
    return %c0_i32, %c0_i32_0 : i32, i32
  }
  func.func @transform_6(%arg0: i32) -> (i32, i32) {
    %c0_i32 = arith.constant 0 : i32
    %c0_i32_0 = arith.constant 0 : i32
    return %arg0, %c0_i32 : i32, i32
  }
}

module attributes {stable_mosaic.version = 11 : i64} {
  func.func @kernel(%arg0: i32, %arg1: memref<16x48xf32, #tpu.memory_space<vmem>>, %arg2: memref<48x32xf32, #tpu.memory_space<vmem>>, %arg3: memref<48x32xf32, #tpu.memory_space<vmem>>, %arg4: memref<48x64xf32, #tpu.memory_space<vmem>>, %arg5: memref<32x64xf32, #tpu.memory_space<vmem>>, %arg6: memref<1x64xf32, #tpu.memory_space<vmem>>, %arg7: memref<16x64xf32, #tpu.memory_space<vmem>>) attributes {dimension_semantics = [#tpu.dimension_semantics<parallel>], iteration_bounds = array<i64: 1>, scalar_prefetch = 0 : i64, scratch_operands = 0 : i64, tpu.core_type = #tpu.core_type<tc>, window_params = [{transform_indices = @transform_0, window_bounds = array<i64: 16, 48>}, {pipeline_mode = #tpu.pipeline_mode<synchronous>, transform_indices = @transform_1, window_bounds = array<i64: 48, 32>}, {pipeline_mode = #tpu.pipeline_mode<synchronous>, transform_indices = @transform_2, window_bounds = array<i64: 48, 32>}, {pipeline_mode = #tpu.pipeline_mode<synchronous>, transform_indices = @transform_3, window_bounds = array<i64: 48, 64>}, {pipeline_mode = #tpu.pipeline_mode<synchronous>, transform_indices = @transform_4, window_bounds = array<i64: 32, 64>}, {pipeline_mode = #tpu.pipeline_mode<synchronous>, transform_indices = @transform_5, window_bounds = array<i64: 1, 64>}, {transform_indices = @transform_6, window_bounds = array<i64: 16, 64>}]} {
    %c0 = arith.constant 0 : index
    %c0_0 = arith.constant 0 : index
    %0 = vector.load %arg1[%c0, %c0_0] : memref<16x48xf32, #tpu.memory_space<vmem>>, vector<16x48xf32>
    %c0_1 = arith.constant 0 : index
    %c0_2 = arith.constant 0 : index
    %1 = vector.load %arg2[%c0_1, %c0_2] : memref<48x32xf32, #tpu.memory_space<vmem>>, vector<48x32xf32>
    %cst = arith.constant dense<0.000000e+00> : vector<16x32xf32>
    %2 = tpu.matmul %0, %1, %cst {dimension_numbers = #tpu.dot_dimension_numbers<[1], [0], [0], [1], [0, 0, 1, 1], [], []>} : vector<16x48xf32>, vector<48x32xf32>, vector<16x32xf32> -> vector<16x32xf32>
    %3 = arith.mulf %0, %0 : vector<16x48xf32>
    %c0_3 = arith.constant 0 : index
    %c0_4 = arith.constant 0 : index
    %4 = vector.load %arg3[%c0_3, %c0_4] : memref<48x32xf32, #tpu.memory_space<vmem>>, vector<48x32xf32>
    %cst_5 = arith.constant dense<0.000000e+00> : vector<16x32xf32>
    %5 = tpu.matmul %3, %4, %cst_5 {dimension_numbers = #tpu.dot_dimension_numbers<[1], [0], [0], [1], [0, 0, 1, 1], [], []>} : vector<16x48xf32>, vector<48x32xf32>, vector<16x32xf32> -> vector<16x32xf32>
    %6 = arith.mulf %2, %2 : vector<16x32xf32>
    %7 = arith.subf %6, %5 : vector<16x32xf32>
    %cst_6 = arith.constant 5.000000e-01 : f32
    %8 = vector.broadcast %cst_6 : f32 to vector<16x32xf32>
    %9 = arith.mulf %8, %7 : vector<16x32xf32>
    %c0_7 = arith.constant 0 : index
    %c0_8 = arith.constant 0 : index
    %10 = vector.load %arg4[%c0_7, %c0_8] : memref<48x64xf32, #tpu.memory_space<vmem>>, vector<48x64xf32>
    %cst_9 = arith.constant dense<0.000000e+00> : vector<16x64xf32>
    %11 = tpu.matmul %0, %10, %cst_9 {dimension_numbers = #tpu.dot_dimension_numbers<[1], [0], [0], [1], [0, 0, 1, 1], [], []>} : vector<16x48xf32>, vector<48x64xf32>, vector<16x64xf32> -> vector<16x64xf32>
    %c0_10 = arith.constant 0 : index
    %c0_11 = arith.constant 0 : index
    %12 = vector.load %arg5[%c0_10, %c0_11] : memref<32x64xf32, #tpu.memory_space<vmem>>, vector<32x64xf32>
    %cst_12 = arith.constant dense<0.000000e+00> : vector<16x64xf32>
    %13 = tpu.matmul %9, %12, %cst_12 {dimension_numbers = #tpu.dot_dimension_numbers<[1], [0], [0], [1], [0, 0, 1, 1], [], []>} : vector<16x32xf32>, vector<32x64xf32>, vector<16x64xf32> -> vector<16x64xf32>
    %14 = arith.addf %11, %13 : vector<16x64xf32>
    %c0_13 = arith.constant 0 : index
    %c0_14 = arith.constant 0 : index
    %15 = vector.load %arg6[%c0_13, %c0_14] : memref<1x64xf32, #tpu.memory_space<vmem>>, vector<1x64xf32>
    %16 = vector.broadcast %15 : vector<1x64xf32> to vector<16x64xf32>
    %17 = arith.addf %14, %16 : vector<16x64xf32>
    %18 = math.tanh %17 : vector<16x64xf32>
    %c0_15 = arith.constant 0 : index
    %c0_16 = arith.constant 0 : index
    %19 = vector.load %arg7[%c0_15, %c0_16] : memref<16x64xf32, #tpu.memory_space<vmem>>, vector<16x64xf32>
    tpu.vector_store %arg7[%c0_15, %c0_16], %18 {strides = array<i32>} : memref<16x64xf32, #tpu.memory_space<vmem>>, vector<16x64xf32>,
    return
  }
  func.func @transform_0(%arg0: i32) -> (i32, i32) {
    %c0_i32 = arith.constant 0 : i32
    %c0_i32_0 = arith.constant 0 : i32
    return %arg0, %c0_i32 : i32, i32
  }
  func.func @transform_1(%arg0: i32) -> (i32, i32) {
    %c0_i32 = arith.constant 0 : i32
    %c0_i32_0 = arith.constant 0 : i32
    %c0_i32_1 = arith.constant 0 : i32
    return %c0_i32, %c0_i32_0 : i32, i32
  }
  func.func @transform_2(%arg0: i32) -> (i32, i32) {
    %c0_i32 = arith.constant 0 : i32
    %c0_i32_0 = arith.constant 0 : i32
    %c0_i32_1 = arith.constant 0 : i32
    return %c0_i32, %c0_i32_0 : i32, i32
  }
  func.func @transform_3(%arg0: i32) -> (i32, i32) {
    %c0_i32 = arith.constant 0 : i32
    %c0_i32_0 = arith.constant 0 : i32
    %c0_i32_1 = arith.constant 0 : i32
    return %c0_i32, %c0_i32_0 : i32, i32
  }
  func.func @transform_4(%arg0: i32) -> (i32, i32) {
    %c0_i32 = arith.constant 0 : i32
    %c0_i32_0 = arith.constant 0 : i32
    %c0_i32_1 = arith.constant 0 : i32
    return %c0_i32, %c0_i32_0 : i32, i32
  }
  func.func @transform_5(%arg0: i32) -> (i32, i32) {
    %c0_i32 = arith.constant 0 : i32
    %c0_i32_0 = arith.constant 0 : i32
    %c0_i32_1 = arith.constant 0 : i32
    return %c0_i32, %c0_i32_0 : i32, i32
  }
  func.func @transform_6(%arg0: i32) -> (i32, i32) {
    %c0_i32 = arith.constant 0 : i32
    %c0_i32_0 = arith.constant 0 : i32
    return %arg0, %c0_i32 : i32, i32
  }
}

module attributes {stable_mosaic.version = 11 : i64} {
  func.func @kernel(%arg0: i32, %arg1: memref<16x48xf32, #tpu.memory_space<vmem>>, %arg2: memref<48x32xf32, #tpu.memory_space<vmem>>, %arg3: memref<48x32xf32, #tpu.memory_space<vmem>>, %arg4: memref<48x64xf32, #tpu.memory_space<vmem>>, %arg5: memref<32x64xf32, #tpu.memory_space<vmem>>, %arg6: memref<1x64xf32, #tpu.memory_space<vmem>>, %arg7: memref<16x64xf32, #tpu.memory_space<vmem>>) attributes {dimension_semantics = [#tpu.dimension_semantics<parallel>], iteration_bounds = array<i64: 1>, scalar_prefetch = 0 : i64, scratch_operands = 0 : i64, tpu.core_type = #tpu.core_type<tc>, window_params = [{transform_indices = @transform_0, window_bounds = array<i64: 16, 48>}, {pipeline_mode = #tpu.pipeline_mode<synchronous>, transform_indices = @transform_1, window_bounds = array<i64: 48, 32>}, {pipeline_mode = #tpu.pipeline_mode<synchronous>, transform_indices = @transform_2, window_bounds = array<i64: 48, 32>}, {pipeline_mode = #tpu.pipeline_mode<synchronous>, transform_indices = @transform_3, window_bounds = array<i64: 48, 64>}, {pipeline_mode = #tpu.pipeline_mode<synchronous>, transform_indices = @transform_4, window_bounds = array<i64: 32, 64>}, {pipeline_mode = #tpu.pipeline_mode<synchronous>, transform_indices = @transform_5, window_bounds = array<i64: 1, 64>}, {transform_indices = @transform_6, window_bounds = array<i64: 16, 64>}]} {
    %c0 = arith.constant 0 : index
    %c0_0 = arith.constant 0 : index
    %0 = vector.load %arg1[%c0, %c0_0] : memref<16x48xf32, #tpu.memory_space<vmem>>, vector<16x48xf32>
    %c0_1 = arith.constant 0 : index
    %c0_2 = arith.constant 0 : index
    %1 = vector.load %arg2[%c0_1, %c0_2] : memref<48x32xf32, #tpu.memory_space<vmem>>, vector<48x32xf32>
    %cst = arith.constant dense<0.000000e+00> : vector<16x32xf32>
    %2 = tpu.matmul %0, %1, %cst {dimension_numbers = #tpu.dot_dimension_numbers<[1], [0], [0], [1], [0, 0, 1, 1], [], []>} : vector<16x48xf32>, vector<48x32xf32>, vector<16x32xf32> -> vector<16x32xf32>
    %3 = arith.mulf %0, %0 : vector<16x48xf32>
    %c0_3 = arith.constant 0 : index
    %c0_4 = arith.constant 0 : index
    %4 = vector.load %arg3[%c0_3, %c0_4] : memref<48x32xf32, #tpu.memory_space<vmem>>, vector<48x32xf32>
    %cst_5 = arith.constant dense<0.000000e+00> : vector<16x32xf32>
    %5 = tpu.matmul %3, %4, %cst_5 {dimension_numbers = #tpu.dot_dimension_numbers<[1], [0], [0], [1], [0, 0, 1, 1], [], []>} : vector<16x48xf32>, vector<48x32xf32>, vector<16x32xf32> -> vector<16x32xf32>
    %6 = arith.mulf %2, %2 : vector<16x32xf32>
    %7 = arith.subf %6, %5 : vector<16x32xf32>
    %cst_6 = arith.constant 5.000000e-01 : f32
    %8 = vector.broadcast %cst_6 : f32 to vector<16x32xf32>
    %9 = arith.mulf %8, %7 : vector<16x32xf32>
    %c0_7 = arith.constant 0 : index
    %c0_8 = arith.constant 0 : index
    %10 = vector.load %arg4[%c0_7, %c0_8] : memref<48x64xf32, #tpu.memory_space<vmem>>, vector<48x64xf32>
    %cst_9 = arith.constant dense<0.000000e+00> : vector<16x64xf32>
    %11 = tpu.matmul %0, %10, %cst_9 {dimension_numbers = #tpu.dot_dimension_numbers<[1], [0], [0], [1], [0, 0, 1, 1], [], []>} : vector<16x48xf32>, vector<48x64xf32>, vector<16x64xf32> -> vector<16x64xf32>
    %c0_10 = arith.constant 0 : index
    %c0_11 = arith.constant 0 : index
    %12 = vector.load %arg5[%c0_10, %c0_11] : memref<32x64xf32, #tpu.memory_space<vmem>>, vector<32x64xf32>
    %cst_12 = arith.constant dense<0.000000e+00> : vector<16x64xf32>
    %13 = tpu.matmul %9, %12, %cst_12 {dimension_numbers = #tpu.dot_dimension_numbers<[1], [0], [0], [1], [0, 0, 1, 1], [], []>} : vector<16x32xf32>, vector<32x64xf32>, vector<16x64xf32> -> vector<16x64xf32>
    %14 = arith.addf %11, %13 : vector<16x64xf32>
    %c0_13 = arith.constant 0 : index
    %c0_14 = arith.constant 0 : index
    %15 = vector.load %arg6[%c0_13, %c0_14] : memref<1x64xf32, #tpu.memory_space<vmem>>, vector<1x64xf32>
    %16 = vector.broadcast %15 : vector<1x64xf32> to vector<16x64xf32>
    %17 = arith.addf %14, %16 : vector<16x64xf32>
    %18 = math.tanh %17 : vector<16x64xf32>
    %c0_15 = arith.constant 0 : index
    %c0_16 = arith.constant 0 : index
    %19 = vector.load %arg7[%c0_15, %c0_16] : memref<16x64xf32, #tpu.memory_space<vmem>>, vector<16x64xf32>
    tpu.vector_store %arg7[%c0_15, %c0_16], %18 {strides = array<i32>} : memref<16x64xf32, #tpu.memory_space<vmem>>, vector<16x64xf32>,
    return
  }
  func.func @transform_0(%arg0: i32) -> (i32, i32) {
    %c0_i32 = arith.constant 0 : i32
    %c0_i32_0 = arith.constant 0 : i32
    return %arg0, %c0_i32 : i32, i32
  }
  func.func @transform_1(%arg0: i32) -> (i32, i32) {
    %c0_i32 = arith.constant 0 : i32
    %c0_i32_0 = arith.constant 0 : i32
    %c0_i32_1 = arith.constant 0 : i32
    return %c0_i32, %c0_i32_0 : i32, i32
  }
  func.func @transform_2(%arg0: i32) -> (i32, i32) {
    %c0_i32 = arith.constant 0 : i32
    %c0_i32_0 = arith.constant 0 : i32
    %c0_i32_1 = arith.constant 0 : i32
    return %c0_i32, %c0_i32_0 : i32, i32
  }
  func.func @transform_3(%arg0: i32) -> (i32, i32) {
    %c0_i32 = arith.constant 0 : i32
    %c0_i32_0 = arith.constant 0 : i32
    %c0_i32_1 = arith.constant 0 : i32
    return %c0_i32, %c0_i32_0 : i32, i32
  }
  func.func @transform_4(%arg0: i32) -> (i32, i32) {
    %c0_i32 = arith.constant 0 : i32
    %c0_i32_0 = arith.constant 0 : i32
    %c0_i32_1 = arith.constant 0 : i32
    return %c0_i32, %c0_i32_0 : i32, i32
  }
  func.func @transform_5(%arg0: i32) -> (i32, i32) {
    %c0_i32 = arith.constant 0 : i32
    %c0_i32_0 = arith.constant 0 : i32
    %c0_i32_1 = arith.constant 0 : i32
    return %c0_i32, %c0_i32_0 : i32, i32
  }
  func.func @transform_6(%arg0: i32) -> (i32, i32) {
    %c0_i32 = arith.constant 0 : i32
    %c0_i32_0 = arith.constant 0 : i32
    return %arg0, %c0_i32 : i32, i32
  }
}

</mosaic_0001>

<llo_original>
// kernel: tpu_custom_call.1
$region0: #{tpu_custom_call.1}
  #allocation0 [shape = 'u32[]', space=smem, size = 0x4, offset = 0x4, fixed_abs, tag = 'smem constant byte address 0x4 - core index']
  #allocation1 [shape = 'u32[72,128]{1,0:T(1,128)}', space=vmem, size = 0x9000, scoped, tag = 'internal scratch']
  %s0 = inlined_call_operand.vmem [shape: f32[8,96], index: 0, kind: input, shape index: {}]
  %s1 = inlined_call_operand.vmem [shape: f32[48,32], index: 1, kind: input, shape index: {}]
  %s2 = inlined_call_operand.vmem [shape: f32[48,32], index: 2, kind: input, shape index: {}]
  %s3 = inlined_call_operand.vmem [shape: f32[48,64], index: 3, kind: input, shape index: {}]
  %s4 = inlined_call_operand.vmem [shape: f32[32,64], index: 4, kind: input, shape index: {}]
  %s5 = inlined_call_operand.vmem [shape: f32[1,64], index: 5, kind: input, shape index: {}]
  %s6 = inlined_call_operand.hbm [shape: f32[8,128], index: 6, kind: output, shape index: {}]
  %s7 = sld [smem:[#allocation0]]
  $region34: #{tpu_custom_call.1} parent=0
    _
  %s9 = ssub.s32 1, %s7
  %s10 = scalar_select 0, %s9, %s7
  $region1: #{tpu_custom_call.1} parent=0
    #allocation2 [shape = 'u8[4096]{0}', space=vmem, size = 0x1000, scoped, tag = 'output window, operand 0, single buffered']
    #allocation3 [shape = 's32[1]{0}', space=sflag, size = 0x4, scoped, tag = 'scoped memory for tpu_custom_call.1']
    %11 = vsyncpa [#allocation3], 0
    // Predicated region
    $region2: #{tpu_custom_call.1} parent=1 // pred_check
      _
    $region3: #{tpu_custom_call.1} parent=1 // pred_check_branch
      %13 = sbr.rel (0) target = $region5
    $region4: #{tpu_custom_call.1} parent=1 // pred_region
      _
    $region5: #{tpu_custom_call.1} parent=1 // pred_fallthru
      _
    // Predicated region
    $region6: #{tpu_custom_call.1} parent=1 // pred_check
      _
    $region7: #{tpu_custom_call.1} parent=1 // pred_check_branch
      %15 = sbr.rel (0) target = $region9
    $region8: #{tpu_custom_call.1} parent=1 // pred_region
      _
    $region9: #{tpu_custom_call.1} parent=1 // pred_fallthru
      _
    // Predicated region
    $region10: #{tpu_custom_call.1} parent=1 // pred_check
      _
    $region11: #{tpu_custom_call.1} parent=1 // pred_check_branch
      %17 = sbr.rel (0) target = $region13
    $region12: #{tpu_custom_call.1} parent=1 // pred_region
      _
    $region13: #{tpu_custom_call.1} parent=1 // pred_fallthru
      _
    // Predicated region
    $region14: #{tpu_custom_call.1} parent=1 // pred_check
      _
    $region15: #{tpu_custom_call.1} parent=1 // pred_check_branch
      %19 = sbr.rel (0) target = $region17
    $region16: #{tpu_custom_call.1} parent=1 // pred_region
      _
    $region17: #{tpu_custom_call.1} parent=1 // pred_fallthru
      _
    // Predicated region
    $region18: #{tpu_custom_call.1} parent=1 // pred_check
      _
    $region19: #{tpu_custom_call.1} parent=1 // pred_check_branch
      %21 = sbr.rel (0) target = $region21
    $region20: #{tpu_custom_call.1} parent=1 // pred_region
      _
    $region21: #{tpu_custom_call.1} parent=1 // pred_fallthru
      _
    // Predicated region
    $region22: #{tpu_custom_call.1} parent=1 // pred_check
      _
    $region23: #{tpu_custom_call.1} parent=1 // pred_check_branch
      %23 = sbr.rel (0) target = $region25
    $region24: #{tpu_custom_call.1} parent=1 // pred_region
      _
    $region25: #{tpu_custom_call.1} parent=1 // pred_fallthru
      _
    %v24 = vld [vmem:[%s0] sm:$0xff]
    %26 = vrot.lane.b32.xlu0 %v24, 80
    %v27 = vpop.permute.xlu0 %26
    %v29 = vld [vmem:[%s1] sm:$0xff]
    %v30 = vld [vmem:[%s1 + $0x8] sm:$0xff]
    %v31 = vld [vmem:[%s1 + $0x10] sm:$0xff]
    %v32 = vld [vmem:[%s1 + $0x18] sm:$0xff]
    %v33 = vld [vmem:[%s1 + $0x20] sm:$0xff]
    %v34 = vld [vmem:[%s1 + $0x28] sm:$0xff]
    %vm35 = vcmask 392192
    %v36 = vsel %vm35, %v24, 0
    %v38 = vsel %vm35, %v27, 0
    %40 = vmatpush.msra.mxu0 0.0
    %41 = vmatpush.msra.mxu0 0.0
    %42 = vmatpush.msra.mxu0 0.0
    %43 = vmatpush.msra.mxu0 0.0
    %44 = vmatpush.msra.mxu0 0.0
    %45 = vmatpush.msra.mxu0 0.0
    %46 = vmatpush.msra.mxu0 0.0
    %47 = vmatpush.msra.mxu0 0.0
    %48 = vmatpush.msra.mxu0 0.0
    %49 = vmatpush.msra.mxu0 0.0
    %50 = vmatpush.msra.mxu0 %v34
    %51 = vmatpush.msra.mxu0 %v33
    %52 = vmatpush.msra.mxu0 %v32
    %53 = vmatpush.msra.mxu0 %v31
    %54 = vmatpush.msra.mxu0 %v30
    %55 = vmatpush.msra.mxu0 %v29
    %56 = vmatmul.f32.gmra.mxu0 %v36
    %v57 = vpop.f32.mrf.mxu0
    %v58 = vadd.f32 0.0, %v57
    %59 = vmatmul.f32.gmra.mxu0 %v38
    %v60 = vpop.f32.mrf.mxu0
    %v61 = vadd.f32 0.0, %v60
    %62 = vdwg.mxu0
    %v63 = vmul.f32 %v24, %v24
    %v64 = vmul.f32 %v27, %v27
    %v65 = vld [vmem:[%s2] sm:$0xff]
    %v66 = vld [vmem:[%s2 + $0x8] sm:$0xff]
    %v67 = vld [vmem:[%s2 + $0x10] sm:$0xff]
    %v68 = vld [vmem:[%s2 + $0x18] sm:$0xff]
    %v69 = vld [vmem:[%s2 + $0x20] sm:$0xff]
    %v70 = vld [vmem:[%s2 + $0x28] sm:$0xff]
    %v72 = vsel %vm35, %v63, 0
    %v75 = vsel %vm35, %v64, 0
    %77 = vmatpush.msra.mxu0 0.0
    %78 = vmatpush.msra.mxu0 0.0
    %79 = vmatpush.msra.mxu0 0.0
    %80 = vmatpush.msra.mxu0 0.0
    %81 = vmatpush.msra.mxu0 0.0
    %82 = vmatpush.msra.mxu0 0.0
    %83 = vmatpush.msra.mxu0 0.0
    %84 = vmatpush.msra.mxu0 0.0
    %85 = vmatpush.msra.mxu0 0.0
    %86 = vmatpush.msra.mxu0 0.0
    %87 = vmatpush.msra.mxu0 %v70
    %88 = vmatpush.msra.mxu0 %v69
    %89 = vmatpush.msra.mxu0 %v68
    %90 = vmatpush.msra.mxu0 %v67
    %91 = vmatpush.msra.mxu0 %v66
    %92 = vmatpush.msra.mxu0 %v65
    %93 = vmatmul.f32.gmra.mxu0 %v72
    %v94 = vpop.f32.mrf.mxu0
    %v95 = vadd.f32 0.0, %v94
    %96 = vmatmul.f32.gmra.mxu0 %v75
    %v97 = vpop.f32.mrf.mxu0
    %v98 = vadd.f32 0.0, %v97
    %99 = vdwg.mxu0
    %v100 = vmul.f32 %v58, %v58
    %v101 = vmul.f32 %v61, %v61
    %v102 = vsub.f32 %v100, %v95
    %v103 = vsub.f32 %v101, %v98
    %v104 = vmul.f32 %v102, 0.5
    %v105 = vmul.f32 %v103, 0.5
    %v106 = vld [vmem:[%s3] sm:$0xff]
    %v107 = vld [vmem:[%s3 + $0x8] sm:$0xff]
    %v108 = vld [vmem:[%s3 + $0x10] sm:$0xff]
    %v109 = vld [vmem:[%s3 + $0x18] sm:$0xff]
    %v110 = vld [vmem:[%s3 + $0x20] sm:$0xff]
    %v111 = vld [vmem:[%s3 + $0x28] sm:$0xff]
    %v112 = vld [vmem:[%s4] sm:$0xff]
    %v113 = vld [vmem:[%s4 + $0x8] sm:$0xff]
    %v114 = vld [vmem:[%s4 + $0x10] sm:$0xff]
    %v115 = vld [vmem:[%s4 + $0x18] sm:$0xff]
    %vm116 = vcmask 261120
    %v118 = vsel %vm116, %v104, 0
    %v121 = vsel %vm116, %v105, 0
    %123 = vmatpush.msra.mxu0 0.0
    %124 = vmatpush.msra.mxu0 0.0
    %125 = vmatpush.msra.mxu0 0.0
    %126 = vmatpush.msra.mxu0 0.0
    %127 = vmatpush.msra.mxu0 0.0
    %128 = vmatpush.msra.mxu0 0.0
    %129 = vmatpush.msra.mxu0 0.0
    %130 = vmatpush.msra.mxu0 0.0
    %131 = vmatpush.msra.mxu0 0.0
    %132 = vmatpush.msra.mxu0 0.0
    %133 = vmatpush.msra.mxu0 0.0
    %134 = vmatpush.msra.mxu0 0.0
    %135 = vmatpush.msra.mxu0 %v115
    %136 = vmatpush.msra.mxu0 %v114
    %137 = vmatpush.msra.mxu0 %v113
    %138 = vmatpush.msra.mxu0 %v112
    %139 = vmatmul.f32.gmra.mxu0 %v118
    %v140 = vpop.f32.mrf.mxu0
    %v141 = vadd.f32 0.0, %v140
    %142 = vmatmul.f32.gmra.mxu0 %v121
    %v143 = vpop.f32.mrf.mxu0
    %v144 = vadd.f32 0.0, %v143
    %145 = vdwg.mxu0
    %146 = vmatpush.msra.mxu0 0.0
    %147 = vmatpush.msra.mxu0 0.0
    %148 = vmatpush.msra.mxu0 0.0
    %149 = vmatpush.msra.mxu0 0.0
    %150 = vmatpush.msra.mxu0 0.0
    %151 = vmatpush.msra.mxu0 0.0
    %152 = vmatpush.msra.mxu0 0.0
    %153 = vmatpush.msra.mxu0 0.0
    %154 = vmatpush.msra.mxu0 0.0
    %155 = vmatpush.msra.mxu0 0.0
    %156 = vmatpush.msra.mxu0 %v111
    %157 = vmatpush.msra.mxu0 %v110
    %158 = vmatpush.msra.mxu0 %v109
    %159 = vmatpush.msra.mxu0 %v108
    %160 = vmatpush.msra.mxu0 %v107
    %161 = vmatpush.msra.mxu0 %v106
    %162 = vmatmul.f32.gmra.mxu0 %v36
    %v163 = vpop.f32.mrf.mxu0
    %v164 = vadd.f32 %v141, %v163
    %165 = vmatmul.f32.gmra.mxu0 %v38
    %v166 = vpop.f32.mrf.mxu0
    %v167 = vadd.f32 %v144, %v166
    %168 = vdwg.mxu0
    %v169 = vld [vmem:[%s5] sm:$0x1]
    %v171 = vperm.slane %v169, 0
    %v173 = vadd.f32 %v164, %v171
    %v174 = vadd.f32 %v167, %v171
    %176 = vrot.lane.b32.xlu0 %v174, 64
    %v177 = vpop.permute.xlu0 %176
    %vm179 = vcmask 523264
    %v180 = vsel %vm179, %v173, %v177
    %v181 = vtanh.pop %v180
    %182 = vst [vmem:[#allocation2] sm:$0xff] %v181
    // Predicated region
    $region26: #{tpu_custom_call.1} parent=1 // pred_check
      _
    $region27: #{tpu_custom_call.1} parent=1 // pred_check_branch
      %184 = sbr.rel (0) target = $region29
    $region28: #{tpu_custom_call.1} parent=1 // pred_region
      %186 = vsyncadd [#allocation3], 0
      %s188 = sshll.u32 [#allocation2], 4
      %s189 = int_to_ptr.vmem [resolvable:$true] %s188
      %s190 = sshll.u32 %s6, 4
      %s191 = int_to_ptr.hbm [resolvable:$true] %s190
      %193 = dma.vmem_to_hbm [thread:$0]  %s189, 128, %s191, [#allocation3]
    $region29: #{tpu_custom_call.1} parent=1 // pred_fallthru
      _
    // Predicated region
    $region30: #{tpu_custom_call.1} parent=1 // pred_check
      _
    $region31: #{tpu_custom_call.1} parent=1 // pred_check_branch
      %195 = sbr.rel (0) target = $region33
    $region32: #{tpu_custom_call.1} parent=1 // pred_region
      %197 = dma.done [#allocation3], 128
    $region33: #{tpu_custom_call.1} parent=1 // pred_fallthru
      _
    %198 = vsyncpa [#allocation3], 1

// kernel: tpu_custom_call.1
$region0: #{tpu_custom_call.1}
  #allocation0 [shape = 'u32[]', space=smem, size = 0x4, offset = 0x4, fixed_abs, tag = 'smem constant byte address 0x4 - core index']
  #allocation1 [shape = 'u32[72,128]{1,0:T(1,128)}', space=vmem, size = 0x9000, scoped, tag = 'internal scratch']
  %s0 = inlined_call_operand.vmem [shape: f32[8,96], index: 0, kind: input, shape index: {}]
  %s1 = inlined_call_operand.vmem [shape: f32[48,32], index: 1, kind: input, shape index: {}]
  %s2 = inlined_call_operand.vmem [shape: f32[48,32], index: 2, kind: input, shape index: {}]
  %s3 = inlined_call_operand.vmem [shape: f32[48,64], index: 3, kind: input, shape index: {}]
  %s4 = inlined_call_operand.vmem [shape: f32[32,64], index: 4, kind: input, shape index: {}]
  %s5 = inlined_call_operand.vmem [shape: f32[1,64], index: 5, kind: input, shape index: {}]
  %s6 = inlined_call_operand.hbm [shape: f32[8,128], index: 6, kind: output, shape index: {}]
  %s7 = sld [smem:[#allocation0]]
  $region34: #{tpu_custom_call.1} parent=0
    _
  %s9 = ssub.s32 1, %s7
  %s10 = scalar_select 0, %s9, %s7
  $region1: #{tpu_custom_call.1} parent=0
    #allocation2 [shape = 'u8[4096]{0}', space=vmem, size = 0x1000, scoped, tag = 'output window, operand 0, single buffered']
    #allocation3 [shape = 's32[1]{0}', space=sflag, size = 0x4, scoped, tag = 'scoped memory for tpu_custom_call.1']
    %11 = vsyncpa [#allocation3], 0
    // Predicated region
    $region2: #{tpu_custom_call.1} parent=1 // pred_check
      _
    $region3: #{tpu_custom_call.1} parent=1 // pred_check_branch
      %13 = sbr.rel (0) target = $region5
    $region4: #{tpu_custom_call.1} parent=1 // pred_region
      _
    $region5: #{tpu_custom_call.1} parent=1 // pred_fallthru
      _
    // Predicated region
    $region6: #{tpu_custom_call.1} parent=1 // pred_check
      _
    $region7: #{tpu_custom_call.1} parent=1 // pred_check_branch
      %15 = sbr.rel (0) target = $region9
    $region8: #{tpu_custom_call.1} parent=1 // pred_region
      _
    $region9: #{tpu_custom_call.1} parent=1 // pred_fallthru
      _
    // Predicated region
    $region10: #{tpu_custom_call.1} parent=1 // pred_check
      _
    $region11: #{tpu_custom_call.1} parent=1 // pred_check_branch
      %17 = sbr.rel (0) target = $region13
    $region12: #{tpu_custom_call.1} parent=1 // pred_region
      _
    $region13: #{tpu_custom_call.1} parent=1 // pred_fallthru
      _
    // Predicated region
    $region14: #{tpu_custom_call.1} parent=1 // pred_check
      _
    $region15: #{tpu_custom_call.1} parent=1 // pred_check_branch
      %19 = sbr.rel (0) target = $region17
    $region16: #{tpu_custom_call.1} parent=1 // pred_region
      _
    $region17: #{tpu_custom_call.1} parent=1 // pred_fallthru
      _
    // Predicated region
    $region18: #{tpu_custom_call.1} parent=1 // pred_check
      _
    $region19: #{tpu_custom_call.1} parent=1 // pred_check_branch
      %21 = sbr.rel (0) target = $region21
    $region20: #{tpu_custom_call.1} parent=1 // pred_region
      _
    $region21: #{tpu_custom_call.1} parent=1 // pred_fallthru
      _
    // Predicated region
    $region22: #{tpu_custom_call.1} parent=1 // pred_check
      _
    $region23: #{tpu_custom_call.1} parent=1 // pred_check_branch
      %23 = sbr.rel (0) target = $region25
    $region24: #{tpu_custom_call.1} parent=1 // pred_region
      _
    $region25: #{tpu_custom_call.1} parent=1 // pred_fallthru
      _
    %v24 = vld [vmem:[%s0] sm:$0xff]
    %26 = vrot.lane.b32.xlu0 %v24, 80
    %v27 = vpop.permute.xlu0 %26
    %v29 = vld [vmem:[%s1] sm:$0xff]
    %v30 = vld [vmem:[%s1 + $0x8] sm:$0xff]
    %v31 = vld [vmem:[%s1 + $0x10] sm:$0xff]
    %v32 = vld [vmem:[%s1 + $0x18] sm:$0xff]
    %v33 = vld [vmem:[%s1 + $0x20] sm:$0xff]
    %v34 = vld [vmem:[%s1 + $0x28] sm:$0xff]
    %vm35 = vcmask 392192
    %v36 = vsel %vm35, %v24, 0
    %v38 = vsel %vm35, %v27, 0
    %40 = vmatpush.msra.mxu0 0.0
    %41 = vmatpush.msra.mxu0 0.0
    %42 = vmatpush.msra.mxu0 0.0
    %43 = vmatpush.msra.mxu0 0.0
    %44 = vmatpush.msra.mxu0 0.0
    %45 = vmatpush.msra.mxu0 0.0
    %46 = vmatpush.msra.mxu0 0.0
    %47 = vmatpush.msra.mxu0 0.0
    %48 = vmatpush.msra.mxu0 0.0
    %49 = vmatpush.msra.mxu0 0.0
    %50 = vmatpush.msra.mxu0 %v34
    %51 = vmatpush.msra.mxu0 %v33
    %52 = vmatpush.msra.mxu0 %v32
    %53 = vmatpush.msra.mxu0 %v31
    %54 = vmatpush.msra.mxu0 %v30
    %55 = vmatpush.msra.mxu0 %v29
    %56 = vmatmul.f32.gmra.mxu0 %v36
    %v57 = vpop.f32.mrf.mxu0
    %v58 = vadd.f32 0.0, %v57
    %59 = vmatmul.f32.gmra.mxu0 %v38
    %v60 = vpop.f32.mrf.mxu0
    %v61 = vadd.f32 0.0, %v60
    %62 = vdwg.mxu0
    %v63 = vmul.f32 %v24, %v24
    %v64 = vmul.f32 %v27, %v27
    %v65 = vld [vmem:[%s2] sm:$0xff]
    %v66 = vld [vmem:[%s2 + $0x8] sm:$0xff]
    %v67 = vld [vmem:[%s2 + $0x10] sm:$0xff]
    %v68 = vld [vmem:[%s2 + $0x18] sm:$0xff]
    %v69 = vld [vmem:[%s2 + $0x20] sm:$0xff]
    %v70 = vld [vmem:[%s2 + $0x28] sm:$0xff]
    %v72 = vsel %vm35, %v63, 0
    %v75 = vsel %vm35, %v64, 0
    %77 = vmatpush.msra.mxu0 0.0
    %78 = vmatpush.msra.mxu0 0.0
    %79 = vmatpush.msra.mxu0 0.0
    %80 = vmatpush.msra.mxu0 0.0
    %81 = vmatpush.msra.mxu0 0.0
    %82 = vmatpush.msra.mxu0 0.0
    %83 = vmatpush.msra.mxu0 0.0
    %84 = vmatpush.msra.mxu0 0.0
    %85 = vmatpush.msra.mxu0 0.0
    %86 = vmatpush.msra.mxu0 0.0
    %87 = vmatpush.msra.mxu0 %v70
    %88 = vmatpush.msra.mxu0 %v69
    %89 = vmatpush.msra.mxu0 %v68
    %90 = vmatpush.msra.mxu0 %v67
    %91 = vmatpush.msra.mxu0 %v66
    %92 = vmatpush.msra.mxu0 %v65
    %93 = vmatmul.f32.gmra.mxu0 %v72
    %v94 = vpop.f32.mrf.mxu0
    %v95 = vadd.f32 0.0, %v94
    %96 = vmatmul.f32.gmra.mxu0 %v75
    %v97 = vpop.f32.mrf.mxu0
    %v98 = vadd.f32 0.0, %v97
    %99 = vdwg.mxu0
    %v100 = vmul.f32 %v58, %v58
    %v101 = vmul.f32 %v61, %v61
    %v102 = vsub.f32 %v100, %v95
    %v103 = vsub.f32 %v101, %v98
    %v104 = vmul.f32 %v102, 0.5
    %v105 = vmul.f32 %v103, 0.5
    %v106 = vld [vmem:[%s3] sm:$0xff]
    %v107 = vld [vmem:[%s3 + $0x8] sm:$0xff]
    %v108 = vld [vmem:[%s3 + $0x10] sm:$0xff]
    %v109 = vld [vmem:[%s3 + $0x18] sm:$0xff]
    %v110 = vld [vmem:[%s3 + $0x20] sm:$0xff]
    %v111 = vld [vmem:[%s3 + $0x28] sm:$0xff]
    %v112 = vld [vmem:[%s4] sm:$0xff]
    %v113 = vld [vmem:[%s4 + $0x8] sm:$0xff]
    %v114 = vld [vmem:[%s4 + $0x10] sm:$0xff]
    %v115 = vld [vmem:[%s4 + $0x18] sm:$0xff]
    %vm116 = vcmask 261120
    %v118 = vsel %vm116, %v104, 0
    %v121 = vsel %vm116, %v105, 0
    %123 = vmatpush.msra.mxu0 0.0
    %124 = vmatpush.msra.mxu0 0.0
    %125 = vmatpush.msra.mxu0 0.0
    %126 = vmatpush.msra.mxu0 0.0
    %127 = vmatpush.msra.mxu0 0.0
    %128 = vmatpush.msra.mxu0 0.0
    %129 = vmatpush.msra.mxu0 0.0
    %130 = vmatpush.msra.mxu0 0.0
    %131 = vmatpush.msra.mxu0 0.0
    %132 = vmatpush.msra.mxu0 0.0
    %133 = vmatpush.msra.mxu0 0.0
    %134 = vmatpush.msra.mxu0 0.0
    %135 = vmatpush.msra.mxu0 %v115
    %136 = vmatpush.msra.mxu0 %v114
    %137 = vmatpush.msra.mxu0 %v113
    %138 = vmatpush.msra.mxu0 %v112
    %139 = vmatmul.f32.gmra.mxu0 %v118
    %v140 = vpop.f32.mrf.mxu0
    %v141 = vadd.f32 0.0, %v140
    %142 = vmatmul.f32.gmra.mxu0 %v121
    %v143 = vpop.f32.mrf.mxu0
    %v144 = vadd.f32 0.0, %v143
    %145 = vdwg.mxu0
    %146 = vmatpush.msra.mxu0 0.0
    %147 = vmatpush.msra.mxu0 0.0
    %148 = vmatpush.msra.mxu0 0.0
    %149 = vmatpush.msra.mxu0 0.0
    %150 = vmatpush.msra.mxu0 0.0
    %151 = vmatpush.msra.mxu0 0.0
    %152 = vmatpush.msra.mxu0 0.0
    %153 = vmatpush.msra.mxu0 0.0
    %154 = vmatpush.msra.mxu0 0.0
    %155 = vmatpush.msra.mxu0 0.0
    %156 = vmatpush.msra.mxu0 %v111
    %157 = vmatpush.msra.mxu0 %v110
    %158 = vmatpush.msra.mxu0 %v109
    %159 = vmatpush.msra.mxu0 %v108
    %160 = vmatpush.msra.mxu0 %v107
    %161 = vmatpush.msra.mxu0 %v106
    %162 = vmatmul.f32.gmra.mxu0 %v36
    %v163 = vpop.f32.mrf.mxu0
    %v164 = vadd.f32 %v141, %v163
    %165 = vmatmul.f32.gmra.mxu0 %v38
    %v166 = vpop.f32.mrf.mxu0
    %v167 = vadd.f32 %v144, %v166
    %168 = vdwg.mxu0
    %v169 = vld [vmem:[%s5] sm:$0x1]
    %v171 = vperm.slane %v169, 0
    %v173 = vadd.f32 %v164, %v171
    %v174 = vadd.f32 %v167, %v171
    %176 = vrot.lane.b32.xlu0 %v174, 64
    %v177 = vpop.permute.xlu0 %176
    %vm179 = vcmask 523264
    %v180 = vsel %vm179, %v173, %v177
    %v181 = vtanh.pop %v180
    %182 = vst [vmem:[#allocation2] sm:$0xff] %v181
    // Predicated region
    $region26: #{tpu_custom_call.1} parent=1 // pred_check
      _
    $region27: #{tpu_custom_call.1} parent=1 // pred_check_branch
      %184 = sbr.rel (0) target = $region29
    $region28: #{tpu_custom_call.1} parent=1 // pred_region
      %186 = vsyncadd [#allocation3], 0
      %s188 = sshll.u32 [#allocation2], 4
      %s189 = int_to_ptr.vmem [resolvable:$true] %s188
      %s190 = sshll.u32 %s6, 4
      %s191 = int_to_ptr.hbm [resolvable:$true] %s190
      %193 = dma.vmem_to_hbm [thread:$0]  %s189, 128, %s191, [#allocation3]
    $region29: #{tpu_custom_call.1} parent=1 // pred_fallthru
      _
    // Predicated region
    $region30: #{tpu_custom_call.1} parent=1 // pred_check
      _
    $region31: #{tpu_custom_call.1} parent=1 // pred_check_branch
      %195 = sbr.rel (0) target = $region33
    $region32: #{tpu_custom_call.1} parent=1 // pred_region
      %197 = dma.done [#allocation3], 128
    $region33: #{tpu_custom_call.1} parent=1 // pred_fallthru
      _
    %198 = vsyncpa [#allocation3], 1

// kernel: tpu_custom_call.1
$region0: #{tpu_custom_call.1}
  #allocation0 [shape = 'u32[]', space=smem, size = 0x4, offset = 0x4, fixed_abs, tag = 'smem constant byte address 0x4 - core index']
  #allocation1 [shape = 'u32[72,128]{1,0:T(1,128)}', space=vmem, size = 0x9000, scoped, tag = 'internal scratch']
  %s0 = inlined_call_operand.vmem [shape: f32[16,48], index: 0, kind: input, shape index: {}]
  %s1 = inlined_call_operand.vmem [shape: f32[48,32], index: 1, kind: input, shape index: {}]
  %s2 = inlined_call_operand.vmem [shape: f32[48,32], index: 2, kind: input, shape index: {}]
  %s3 = inlined_call_operand.vmem [shape: f32[48,64], index: 3, kind: input, shape index: {}]
  %s4 = inlined_call_operand.vmem [shape: f32[32,64], index: 4, kind: input, shape index: {}]
  %s5 = inlined_call_operand.vmem [shape: f32[1,64], index: 5, kind: input, shape index: {}]
  %s6 = inlined_call_operand.hbm [shape: f32[16,64], index: 6, kind: output, shape index: {}]
  %s7 = sld [smem:[#allocation0]]
  $region34: #{tpu_custom_call.1} parent=0
    _
  %s9 = ssub.s32 1, %s7
  %s10 = scalar_select 0, %s9, %s7
  $region1: #{tpu_custom_call.1} parent=0
    #allocation2 [shape = 'u8[8192]{0}', space=vmem, size = 0x2000, scoped, tag = 'output window, operand 0, single buffered']
    #allocation3 [shape = 's32[1]{0}', space=sflag, size = 0x4, scoped, tag = 'scoped memory for tpu_custom_call.1']
    %11 = vsyncpa [#allocation3], 0
    // Predicated region
    $region2: #{tpu_custom_call.1} parent=1 // pred_check
      _
    $region3: #{tpu_custom_call.1} parent=1 // pred_check_branch
      %13 = sbr.rel (0) target = $region5
    $region4: #{tpu_custom_call.1} parent=1 // pred_region
      _
    $region5: #{tpu_custom_call.1} parent=1 // pred_fallthru
      _
    // Predicated region
    $region6: #{tpu_custom_call.1} parent=1 // pred_check
      _
    $region7: #{tpu_custom_call.1} parent=1 // pred_check_branch
      %15 = sbr.rel (0) target = $region9
    $region8: #{tpu_custom_call.1} parent=1 // pred_region
      _
    $region9: #{tpu_custom_call.1} parent=1 // pred_fallthru
      _
    // Predicated region
    $region10: #{tpu_custom_call.1} parent=1 // pred_check
      _
    $region11: #{tpu_custom_call.1} parent=1 // pred_check_branch
      %17 = sbr.rel (0) target = $region13
    $region12: #{tpu_custom_call.1} parent=1 // pred_region
      _
    $region13: #{tpu_custom_call.1} parent=1 // pred_fallthru
      _
    // Predicated region
    $region14: #{tpu_custom_call.1} parent=1 // pred_check
      _
    $region15: #{tpu_custom_call.1} parent=1 // pred_check_branch
      %19 = sbr.rel (0) target = $region17
    $region16: #{tpu_custom_call.1} parent=1 // pred_region
      _
    $region17: #{tpu_custom_call.1} parent=1 // pred_fallthru
      _
    // Predicated region
    $region18: #{tpu_custom_call.1} parent=1 // pred_check
      _
    $region19: #{tpu_custom_call.1} parent=1 // pred_check_branch
      %21 = sbr.rel (0) target = $region21
    $region20: #{tpu_custom_call.1} parent=1 // pred_region
      _
    $region21: #{tpu_custom_call.1} parent=1 // pred_fallthru
      _
    // Predicated region
    $region22: #{tpu_custom_call.1} parent=1 // pred_check
      _
    $region23: #{tpu_custom_call.1} parent=1 // pred_check_branch
      %23 = sbr.rel (0) target = $region25
    $region24: #{tpu_custom_call.1} parent=1 // pred_region
      _
    $region25: #{tpu_custom_call.1} parent=1 // pred_fallthru
      _
    %v24 = vld [vmem:[%s0] sm:$0xff]
    %v25 = vld [vmem:[%s0 + $0x8] sm:$0xff]
    %v26 = vld [vmem:[%s1] sm:$0xff]
    %v27 = vld [vmem:[%s1 + $0x8] sm:$0xff]
    %v28 = vld [vmem:[%s1 + $0x10] sm:$0xff]
    %v29 = vld [vmem:[%s1 + $0x18] sm:$0xff]
    %v30 = vld [vmem:[%s1 + $0x20] sm:$0xff]
    %v31 = vld [vmem:[%s1 + $0x28] sm:$0xff]
    %vm32 = vcmask 392192
    %v34 = vsel %vm32, %v24, 0
    %v37 = vsel %vm32, %v25, 0
    %39 = vmatpush.msra.mxu0 0.0
    %40 = vmatpush.msra.mxu0 0.0
    %41 = vmatpush.msra.mxu0 0.0
    %42 = vmatpush.msra.mxu0 0.0
    %43 = vmatpush.msra.mxu0 0.0
    %44 = vmatpush.msra.mxu0 0.0
    %45 = vmatpush.msra.mxu0 0.0
    %46 = vmatpush.msra.mxu0 0.0
    %47 = vmatpush.msra.mxu0 0.0
    %48 = vmatpush.msra.mxu0 0.0
    %49 = vmatpush.msra.mxu0 %v31
    %50 = vmatpush.msra.mxu0 %v30
    %51 = vmatpush.msra.mxu0 %v29
    %52 = vmatpush.msra.mxu0 %v28
    %53 = vmatpush.msra.mxu0 %v27
    %54 = vmatpush.msra.mxu0 %v26
    %55 = vmatmul.f32.gmra.mxu0 %v34
    %v56 = vpop.f32.mrf.mxu0
    %v57 = vadd.f32 0.0, %v56
    %58 = vmatmul.f32.gmra.mxu0 %v37
    %v59 = vpop.f32.mrf.mxu0
    %v60 = vadd.f32 0.0, %v59
    %61 = vdwg.mxu0
    %v62 = vmul.f32 %v24, %v24
    %v63 = vmul.f32 %v25, %v25
    %v64 = vld [vmem:[%s2] sm:$0xff]
    %v65 = vld [vmem:[%s2 + $0x8] sm:$0xff]
    %v66 = vld [vmem:[%s2 + $0x10] sm:$0xff]
    %v67 = vld [vmem:[%s2 + $0x18] sm:$0xff]
    %v68 = vld [vmem:[%s2 + $0x20] sm:$0xff]
    %v69 = vld [vmem:[%s2 + $0x28] sm:$0xff]
    %v71 = vsel %vm32, %v62, 0
    %v74 = vsel %vm32, %v63, 0
    %76 = vmatpush.msra.mxu0 0.0
    %77 = vmatpush.msra.mxu0 0.0
    %78 = vmatpush.msra.mxu0 0.0
    %79 = vmatpush.msra.mxu0 0.0
    %80 = vmatpush.msra.mxu0 0.0
    %81 = vmatpush.msra.mxu0 0.0
    %82 = vmatpush.msra.mxu0 0.0
    %83 = vmatpush.msra.mxu0 0.0
    %84 = vmatpush.msra.mxu0 0.0
    %85 = vmatpush.msra.mxu0 0.0
    %86 = vmatpush.msra.mxu0 %v69
    %87 = vmatpush.msra.mxu0 %v68
    %88 = vmatpush.msra.mxu0 %v67
    %89 = vmatpush.msra.mxu0 %v66
    %90 = vmatpush.msra.mxu0 %v65
    %91 = vmatpush.msra.mxu0 %v64
    %92 = vmatmul.f32.gmra.mxu0 %v71
    %v93 = vpop.f32.mrf.mxu0
    %v94 = vadd.f32 0.0, %v93
    %95 = vmatmul.f32.gmra.mxu0 %v74
    %v96 = vpop.f32.mrf.mxu0
    %v97 = vadd.f32 0.0, %v96
    %98 = vdwg.mxu0
    %v99 = vmul.f32 %v57, %v57
    %v100 = vmul.f32 %v60, %v60
    %v101 = vsub.f32 %v99, %v94
    %v102 = vsub.f32 %v100, %v97
    %v103 = vmul.f32 %v101, 0.5
    %v104 = vmul.f32 %v102, 0.5
    %v105 = vld [vmem:[%s3] sm:$0xff]
    %v106 = vld [vmem:[%s3 + $0x8] sm:$0xff]
    %v107 = vld [vmem:[%s3 + $0x10] sm:$0xff]
    %v108 = vld [vmem:[%s3 + $0x18] sm:$0xff]
    %v109 = vld [vmem:[%s3 + $0x20] sm:$0xff]
    %v110 = vld [vmem:[%s3 + $0x28] sm:$0xff]
    %v111 = vld [vmem:[%s4] sm:$0xff]
    %v112 = vld [vmem:[%s4 + $0x8] sm:$0xff]
    %v113 = vld [vmem:[%s4 + $0x10] sm:$0xff]
    %v114 = vld [vmem:[%s4 + $0x18] sm:$0xff]
    %vm115 = vcmask 261120
    %v117 = vsel %vm115, %v103, 0
    %v120 = vsel %vm115, %v104, 0
    %122 = vmatpush.msra.mxu0 0.0
    %123 = vmatpush.msra.mxu0 0.0
    %124 = vmatpush.msra.mxu0 0.0
    %125 = vmatpush.msra.mxu0 0.0
    %126 = vmatpush.msra.mxu0 0.0
    %127 = vmatpush.msra.mxu0 0.0
    %128 = vmatpush.msra.mxu0 0.0
    %129 = vmatpush.msra.mxu0 0.0
    %130 = vmatpush.msra.mxu0 0.0
    %131 = vmatpush.msra.mxu0 0.0
    %132 = vmatpush.msra.mxu0 0.0
    %133 = vmatpush.msra.mxu0 0.0
    %134 = vmatpush.msra.mxu0 %v114
    %135 = vmatpush.msra.mxu0 %v113
    %136 = vmatpush.msra.mxu0 %v112
    %137 = vmatpush.msra.mxu0 %v111
    %138 = vmatmul.f32.gmra.mxu0 %v117
    %v139 = vpop.f32.mrf.mxu0
    %v140 = vadd.f32 0.0, %v139
    %141 = vmatmul.f32.gmra.mxu0 %v120
    %v142 = vpop.f32.mrf.mxu0
    %v143 = vadd.f32 0.0, %v142
    %144 = vdwg.mxu0
    %145 = vmatpush.msra.mxu0 0.0
    %146 = vmatpush.msra.mxu0 0.0
    %147 = vmatpush.msra.mxu0 0.0
    %148 = vmatpush.msra.mxu0 0.0
    %149 = vmatpush.msra.mxu0 0.0
    %150 = vmatpush.msra.mxu0 0.0
    %151 = vmatpush.msra.mxu0 0.0
    %152 = vmatpush.msra.mxu0 0.0
    %153 = vmatpush.msra.mxu0 0.0
    %154 = vmatpush.msra.mxu0 0.0
    %155 = vmatpush.msra.mxu0 %v110
    %156 = vmatpush.msra.mxu0 %v109
    %157 = vmatpush.msra.mxu0 %v108
    %158 = vmatpush.msra.mxu0 %v107
    %159 = vmatpush.msra.mxu0 %v106
    %160 = vmatpush.msra.mxu0 %v105
    %161 = vmatmul.f32.gmra.mxu0 %v34
    %v162 = vpop.f32.mrf.mxu0
    %v163 = vadd.f32 %v140, %v162
    %164 = vmatmul.f32.gmra.mxu0 %v37
    %v165 = vpop.f32.mrf.mxu0
    %v166 = vadd.f32 %v143, %v165
    %167 = vdwg.mxu0
    %v168 = vld [vmem:[%s5] sm:$0x1]
    %v170 = vperm.slane %v168, 0
    %v172 = vadd.f32 %v163, %v170
    %v173 = vadd.f32 %v166, %v170
    %v174 = vtanh.pop %v172
    %v175 = vtanh.pop %v173
    %vm176 = vcmask 523264
    %177 = vst.msk [vmem:[#allocation2] sm:$0xff] %vm176, %v174
    %178 = vst.msk [vmem:[#allocation2 + $0x8] sm:$0xff] %vm176, %v175
    // Predicated region
    $region26: #{tpu_custom_call.1} parent=1 // pred_check
      _
    $region27: #{tpu_custom_call.1} parent=1 // pred_check_branch
      %180 = sbr.rel (0) target = $region29
    $region28: #{tpu_custom_call.1} parent=1 // pred_region
      %182 = vsyncadd [#allocation3], 0
      %s183 = sshll.u32 [#allocation2], 4
      %s184 = int_to_ptr.vmem [resolvable:$true] %s183
      %s185 = sshll.u32 %s6, 4
      %s186 = int_to_ptr.hbm [resolvable:$true] %s185
      %191 = dma.vmem_to_hbm [thread:$0]  %s184, 256, %s186, [#allocation3], 128, 128, 8
    $region29: #{tpu_custom_call.1} parent=1 // pred_fallthru
      _
    // Predicated region
    $region30: #{tpu_custom_call.1} parent=1 // pred_check
      _
    $region31: #{tpu_custom_call.1} parent=1 // pred_check_branch
      %193 = sbr.rel (0) target = $region33
    $region32: #{tpu_custom_call.1} parent=1 // pred_region
      %195 = dma.done [#allocation3], 256
    $region33: #{tpu_custom_call.1} parent=1 // pred_fallthru
      _
    %196 = vsyncpa [#allocation3], 1

// kernel: tpu_custom_call.1
$region0: #{tpu_custom_call.1}
  #allocation0 [shape = 'u32[]', space=smem, size = 0x4, offset = 0x4, fixed_abs, tag = 'smem constant byte address 0x4 - core index']
  #allocation1 [shape = 'u32[72,128]{1,0:T(1,128)}', space=vmem, size = 0x9000, scoped, tag = 'internal scratch']
  %s0 = inlined_call_operand.vmem [shape: f32[16,48], index: 0, kind: input, shape index: {}]
  %s1 = inlined_call_operand.vmem [shape: f32[48,32], index: 1, kind: input, shape index: {}]
  %s2 = inlined_call_operand.vmem [shape: f32[48,32], index: 2, kind: input, shape index: {}]
  %s3 = inlined_call_operand.vmem [shape: f32[48,64], index: 3, kind: input, shape index: {}]
  %s4 = inlined_call_operand.vmem [shape: f32[32,64], index: 4, kind: input, shape index: {}]
  %s5 = inlined_call_operand.vmem [shape: f32[1,64], index: 5, kind: input, shape index: {}]
  %s6 = inlined_call_operand.hbm [shape: f32[16,64], index: 6, kind: output, shape index: {}]
  %s7 = sld [smem:[#allocation0]]
  $region34: #{tpu_custom_call.1} parent=0
    _
  %s9 = ssub.s32 1, %s7
  %s10 = scalar_select 0, %s9, %s7
  $region1: #{tpu_custom_call.1} parent=0
    #allocation2 [shape = 'u8[8192]{0}', space=vmem, size = 0x2000, scoped, tag = 'output window, operand 0, single buffered']
    #allocation3 [shape = 's32[1]{0}', space=sflag, size = 0x4, scoped, tag = 'scoped memory for tpu_custom_call.1']
    %11 = vsyncpa [#allocation3], 0
    // Predicated region
    $region2: #{tpu_custom_call.1} parent=1 // pred_check
      _
    $region3: #{tpu_custom_call.1} parent=1 // pred_check_branch
      %13 = sbr.rel (0) target = $region5
    $region4: #{tpu_custom_call.1} parent=1 // pred_region
      _
    $region5: #{tpu_custom_call.1} parent=1 // pred_fallthru
      _
    // Predicated region
    $region6: #{tpu_custom_call.1} parent=1 // pred_check
      _
    $region7: #{tpu_custom_call.1} parent=1 // pred_check_branch
      %15 = sbr.rel (0) target = $region9
    $region8: #{tpu_custom_call.1} parent=1 // pred_region
      _
    $region9: #{tpu_custom_call.1} parent=1 // pred_fallthru
      _
    // Predicated region
    $region10: #{tpu_custom_call.1} parent=1 // pred_check
      _
    $region11: #{tpu_custom_call.1} parent=1 // pred_check_branch
      %17 = sbr.rel (0) target = $region13
    $region12: #{tpu_custom_call.1} parent=1 // pred_region
      _
    $region13: #{tpu_custom_call.1} parent=1 // pred_fallthru
      _
    // Predicated region
    $region14: #{tpu_custom_call.1} parent=1 // pred_check
      _
    $region15: #{tpu_custom_call.1} parent=1 // pred_check_branch
      %19 = sbr.rel (0) target = $region17
    $region16: #{tpu_custom_call.1} parent=1 // pred_region
      _
    $region17: #{tpu_custom_call.1} parent=1 // pred_fallthru
      _
    // Predicated region
    $region18: #{tpu_custom_call.1} parent=1 // pred_check
      _
    $region19: #{tpu_custom_call.1} parent=1 // pred_check_branch
      %21 = sbr.rel (0) target = $region21
    $region20: #{tpu_custom_call.1} parent=1 // pred_region
      _
    $region21: #{tpu_custom_call.1} parent=1 // pred_fallthru
      _
    // Predicated region
    $region22: #{tpu_custom_call.1} parent=1 // pred_check
      _
    $region23: #{tpu_custom_call.1} parent=1 // pred_check_branch
      %23 = sbr.rel (0) target = $region25
    $region24: #{tpu_custom_call.1} parent=1 // pred_region
      _
    $region25: #{tpu_custom_call.1} parent=1 // pred_fallthru
      _
    %v24 = vld [vmem:[%s0] sm:$0xff]
    %v25 = vld [vmem:[%s0 + $0x8] sm:$0xff]
    %v26 = vld [vmem:[%s1] sm:$0xff]
    %v27 = vld [vmem:[%s1 + $0x8] sm:$0xff]
    %v28 = vld [vmem:[%s1 + $0x10] sm:$0xff]
    %v29 = vld [vmem:[%s1 + $0x18] sm:$0xff]
    %v30 = vld [vmem:[%s1 + $0x20] sm:$0xff]
    %v31 = vld [vmem:[%s1 + $0x28] sm:$0xff]
    %vm32 = vcmask 392192
    %v34 = vsel %vm32, %v24, 0
    %v37 = vsel %vm32, %v25, 0
    %39 = vmatpush.msra.mxu0 0.0
    %40 = vmatpush.msra.mxu0 0.0
    %41 = vmatpush.msra.mxu0 0.0
    %42 = vmatpush.msra.mxu0 0.0
    %43 = vmatpush.msra.mxu0 0.0
    %44 = vmatpush.msra.mxu0 0.0
    %45 = vmatpush.msra.mxu0 0.0
    %46 = vmatpush.msra.mxu0 0.0
    %47 = vmatpush.msra.mxu0 0.0
    %48 = vmatpush.msra.mxu0 0.0
    %49 = vmatpush.msra.mxu0 %v31
    %50 = vmatpush.msra.mxu0 %v30
    %51 = vmatpush.msra.mxu0 %v29
    %52 = vmatpush.msra.mxu0 %v28
    %53 = vmatpush.msra.mxu0 %v27
    %54 = vmatpush.msra.mxu0 %v26
    %55 = vmatmul.f32.gmra.mxu0 %v34
    %v56 = vpop.f32.mrf.mxu0
    %v57 = vadd.f32 0.0, %v56
    %58 = vmatmul.f32.gmra.mxu0 %v37
    %v59 = vpop.f32.mrf.mxu0
    %v60 = vadd.f32 0.0, %v59
    %61 = vdwg.mxu0
    %v62 = vmul.f32 %v24, %v24
    %v63 = vmul.f32 %v25, %v25
    %v64 = vld [vmem:[%s2] sm:$0xff]
    %v65 = vld [vmem:[%s2 + $0x8] sm:$0xff]
    %v66 = vld [vmem:[%s2 + $0x10] sm:$0xff]
    %v67 = vld [vmem:[%s2 + $0x18] sm:$0xff]
    %v68 = vld [vmem:[%s2 + $0x20] sm:$0xff]
    %v69 = vld [vmem:[%s2 + $0x28] sm:$0xff]
    %v71 = vsel %vm32, %v62, 0
    %v74 = vsel %vm32, %v63, 0
    %76 = vmatpush.msra.mxu0 0.0
    %77 = vmatpush.msra.mxu0 0.0
    %78 = vmatpush.msra.mxu0 0.0
    %79 = vmatpush.msra.mxu0 0.0
    %80 = vmatpush.msra.mxu0 0.0
    %81 = vmatpush.msra.mxu0 0.0
    %82 = vmatpush.msra.mxu0 0.0
    %83 = vmatpush.msra.mxu0 0.0
    %84 = vmatpush.msra.mxu0 0.0
    %85 = vmatpush.msra.mxu0 0.0
    %86 = vmatpush.msra.mxu0 %v69
    %87 = vmatpush.msra.mxu0 %v68
    %88 = vmatpush.msra.mxu0 %v67
    %89 = vmatpush.msra.mxu0 %v66
    %90 = vmatpush.msra.mxu0 %v65
    %91 = vmatpush.msra.mxu0 %v64
    %92 = vmatmul.f32.gmra.mxu0 %v71
    %v93 = vpop.f32.mrf.mxu0
    %v94 = vadd.f32 0.0, %v93
    %95 = vmatmul.f32.gmra.mxu0 %v74
    %v96 = vpop.f32.mrf.mxu0
    %v97 = vadd.f32 0.0, %v96
    %98 = vdwg.mxu0
    %v99 = vmul.f32 %v57, %v57
    %v100 = vmul.f32 %v60, %v60
    %v101 = vsub.f32 %v99, %v94
    %v102 = vsub.f32 %v100, %v97
    %v103 = vmul.f32 %v101, 0.5
    %v104 = vmul.f32 %v102, 0.5
    %v105 = vld [vmem:[%s3] sm:$0xff]
    %v106 = vld [vmem:[%s3 + $0x8] sm:$0xff]
    %v107 = vld [vmem:[%s3 + $0x10] sm:$0xff]
    %v108 = vld [vmem:[%s3 + $0x18] sm:$0xff]
    %v109 = vld [vmem:[%s3 + $0x20] sm:$0xff]
    %v110 = vld [vmem:[%s3 + $0x28] sm:$0xff]
    %v111 = vld [vmem:[%s4] sm:$0xff]
    %v112 = vld [vmem:[%s4 + $0x8] sm:$0xff]
    %v113 = vld [vmem:[%s4 + $0x10] sm:$0xff]
    %v114 = vld [vmem:[%s4 + $0x18] sm:$0xff]
    %vm115 = vcmask 261120
    %v117 = vsel %vm115, %v103, 0
    %v120 = vsel %vm115, %v104, 0
    %122 = vmatpush.msra.mxu0 0.0
    %123 = vmatpush.msra.mxu0 0.0
    %124 = vmatpush.msra.mxu0 0.0
    %125 = vmatpush.msra.mxu0 0.0
    %126 = vmatpush.msra.mxu0 0.0
    %127 = vmatpush.msra.mxu0 0.0
    %128 = vmatpush.msra.mxu0 0.0
    %129 = vmatpush.msra.mxu0 0.0
    %130 = vmatpush.msra.mxu0 0.0
    %131 = vmatpush.msra.mxu0 0.0
    %132 = vmatpush.msra.mxu0 0.0
    %133 = vmatpush.msra.mxu0 0.0
    %134 = vmatpush.msra.mxu0 %v114
    %135 = vmatpush.msra.mxu0 %v113
    %136 = vmatpush.msra.mxu0 %v112
    %137 = vmatpush.msra.mxu0 %v111
    %138 = vmatmul.f32.gmra.mxu0 %v117
    %v139 = vpop.f32.mrf.mxu0
    %v140 = vadd.f32 0.0, %v139
    %141 = vmatmul.f32.gmra.mxu0 %v120
    %v142 = vpop.f32.mrf.mxu0
    %v143 = vadd.f32 0.0, %v142
    %144 = vdwg.mxu0
    %145 = vmatpush.msra.mxu0 0.0
    %146 = vmatpush.msra.mxu0 0.0
    %147 = vmatpush.msra.mxu0 0.0
    %148 = vmatpush.msra.mxu0 0.0
    %149 = vmatpush.msra.mxu0 0.0
    %150 = vmatpush.msra.mxu0 0.0
    %151 = vmatpush.msra.mxu0 0.0
    %152 = vmatpush.msra.mxu0 0.0
    %153 = vmatpush.msra.mxu0 0.0
    %154 = vmatpush.msra.mxu0 0.0
    %155 = vmatpush.msra.mxu0 %v110
    %156 = vmatpush.msra.mxu0 %v109
    %157 = vmatpush.msra.mxu0 %v108
    %158 = vmatpush.msra.mxu0 %v107
    %159 = vmatpush.msra.mxu0 %v106
    %160 = vmatpush.msra.mxu0 %v105
    %161 = vmatmul.f32.gmra.mxu0 %v34
    %v162 = vpop.f32.mrf.mxu0
    %v163 = vadd.f32 %v140, %v162
    %164 = vmatmul.f32.gmra.mxu0 %v37
    %v165 = vpop.f32.mrf.mxu0
    %v166 = vadd.f32 %v143, %v165
    %167 = vdwg.mxu0
    %v168 = vld [vmem:[%s5] sm:$0x1]
    %v170 = vperm.slane %v168, 0
    %v172 = vadd.f32 %v163, %v170
    %v173 = vadd.f32 %v166, %v170
    %v174 = vtanh.pop %v172
    %v175 = vtanh.pop %v173
    %vm176 = vcmask 523264
    %177 = vst.msk [vmem:[#allocation2] sm:$0xff] %vm176, %v174
    %178 = vst.msk [vmem:[#allocation2 + $0x8] sm:$0xff] %vm176, %v175
    // Predicated region
    $region26: #{tpu_custom_call.1} parent=1 // pred_check
      _
    $region27: #{tpu_custom_call.1} parent=1 // pred_check_branch
      %180 = sbr.rel (0) target = $region29
    $region28: #{tpu_custom_call.1} parent=1 // pred_region
      %182 = vsyncadd [#allocation3], 0
      %s183 = sshll.u32 [#allocation2], 4
      %s184 = int_to_ptr.vmem [resolvable:$true] %s183
      %s185 = sshll.u32 %s6, 4
      %s186 = int_to_ptr.hbm [resolvable:$true] %s185
      %191 = dma.vmem_to_hbm [thread:$0]  %s184, 256, %s186, [#allocation3], 128, 128, 8
    $region29: #{tpu_custom_call.1} parent=1 // pred_fallthru
      _
    // Predicated region
    $region30: #{tpu_custom_call.1} parent=1 // pred_check
      _
    $region31: #{tpu_custom_call.1} parent=1 // pred_check_branch
      %193 = sbr.rel (0) target = $region33
    $region32: #{tpu_custom_call.1} parent=1 // pred_region
      %195 = dma.done [#allocation3], 256
    $region33: #{tpu_custom_call.1} parent=1 // pred_fallthru
      _
    %196 = vsyncpa [#allocation3], 1

</llo_original>
